<compile_context>
chip_gen: v5e
topology: v5e:2x2
jax: 0.10.0
libtpu: 0.0.40
codegen_flags: <defaults>
</compile_context>

<pallas_src>
import functools

import jax
import jax.numpy as jnp
from jax.experimental import pallas as pl
from jax.experimental.pallas import tpu as pltpu


# ----------------------------------------------------------------------------
# VMEM budget / tiling helpers
# ----------------------------------------------------------------------------
def _vmem_limit_bytes():
    # ~96 MiB on v5e/v6e (128 MiB physical VMEM), ~48 MiB on v7x (64 MiB).
    try:
        cap = int(pltpu.get_tpu_info().vmem_capacity_bytes)
    except Exception:  # conservative fallback works on every generation
        cap = 64 * 1024 * 1024
    return min(cap * 3 // 4, 100 * 1024 * 1024)


_FUSED_MAX_NPAD = 2048                      # bf16 A_hat <= 8 MiB -> fuse layers
_X_RESIDENT_MAX_BYTES = 8 * 1024 * 1024     # keep X fully VMEM-resident below this
_A_TILE_BUDGET_BYTES = 16 * 1024 * 1024     # double-buffered A_hat tile budget


def _round_up(x, m):
    return ((x + m - 1) // m) * m


def _pad2d(x, rows, cols):
    return jnp.pad(x, ((0, rows - x.shape[0]), (0, cols - x.shape[1])))


def _choose_row_tile(n_pad):
    # Largest row tile that still leaves >= 2 row tiles (v7x megacore) when the
    # graph has more than one 128-row tile at all.
    limit = max(128, n_pad // 2)
    for t in (1024, 512, 256, 128):
        if t <= limit and n_pad % t == 0:
            return t
    return 128


def _choose_k_tile(n_pad, tm):
    # Largest multiple-of-128 divisor of n_pad whose double-buffered (tm, tk)
    # bf16 A_hat tile stays under _A_TILE_BUDGET_BYTES, so per-step DMA time
    # dwarfs the ~0.35 us fixed grid-step overhead.
    best = 128
    t = 128
    while t <= n_pad:
        if n_pad % t == 0 and 2 * tm * t * 2 <= _A_TILE_BUDGET_BYTES:
            best = t
        t += 128
    return best


# ----------------------------------------------------------------------------
# Kernels
# ----------------------------------------------------------------------------
def _layer_kernel(a_ref, x_ref, w_ref, b_ref, o_ref, acc_ref, *, tk,
                  apply_relu, x_resident):
    # out[i] = optional_relu( sum_k A_hat[i,k] @ (X[k] @ W) + b )
    # Feature transform fused: Z is never materialized in HBM.
    k = pl.program_id(1)

    @pl.when(k == 0)
    def _():
        acc_ref[...] = jnp.zeros_like(acc_ref)

    if x_resident:
        start = pl.multiple_of(k * tk, 128)
        x_blk = x_ref[pl.ds(start, tk), :]
    else:
        x_blk = x_ref[...]

    z_blk = jnp.dot(
        x_blk, w_ref[...], preferred_element_type=jnp.float32
    ).astype(jnp.bfloat16)
    acc_ref[...] += jnp.dot(
        a_ref[...], z_blk, preferred_element_type=jnp.float32
    )

    @pl.when(k == pl.num_programs(1) - 1)
    def _():
        out = acc_ref[...] + b_ref[...].astype(jnp.float32)
        if apply_relu:
            out = jnp.maximum(out, 0.0)
        o_ref[...] = out.astype(o_ref.dtype)


def _fused_two_layer_kernel(a_ref, x_ref, w1_ref, b1_ref, w2_ref, b2_ref, o_ref):
    # Whole forward in one kernel: A_hat is read from HBM exactly once.
    a = a_ref[...]
    z1 = jnp.dot(
        x_ref[...], w1_ref[...], preferred_element_type=jnp.float32
    ).astype(jnp.bfloat16)
    h = jnp.dot(a, z1, preferred_element_type=jnp.float32)
    h = jnp.maximum(h + b1_ref[...].astype(jnp.float32), 0.0).astype(jnp.bfloat16)
    z2 = jnp.dot(
        h, w2_ref[...], preferred_element_type=jnp.float32
    ).astype(jnp.bfloat16)
    out = jnp.dot(a, z2, preferred_element_type=jnp.float32)
    o_ref[...] = (out + b2_ref[...].astype(jnp.float32)).astype(o_ref.dtype)


# ----------------------------------------------------------------------------
# Pallas wrappers
# ----------------------------------------------------------------------------
def _gcn_layer(a_p, x_p, w_p, b_p, *, apply_relu, out_dtype):
    """One GCN layer, tiled over (row tiles, A_hat reduction tiles)."""
    n_pad = a_p.shape[0]
    c_in = x_p.shape[1]
    c_out = w_p.shape[1]

    tm = _choose_row_tile(n_pad)
    tk = _choose_k_tile(n_pad, tm)

    x_resident = n_pad * c_in * 2 <= _X_RESIDENT_MAX_BYTES
    if x_resident:
        # X fully VMEM-resident (constant index map): no re-streaming at all.
        x_spec = pl.BlockSpec((n_pad, c_in), lambda i, k: (0, 0))
    else:
        # Fallback for huge graphs: stream X along k (re-fetch fraction c_in/tm).
        x_spec = pl.BlockSpec((tk, c_in), lambda i, k: (k, 0))

    kernel = functools.partial(
        _layer_kernel, tk=tk, apply_relu=apply_relu, x_resident=x_resident)

    return pl.pallas_call(
        kernel,
        out_shape=jax.ShapeDtypeStruct((n_pad, c_out), out_dtype),
        grid_spec=pltpu.PrefetchScalarGridSpec(
            num_scalar_prefetch=0,
            grid=(n_pad // tm, n_pad // tk),
            in_specs=[
                pl.BlockSpec((tm, tk), lambda i, k: (i, k)),      # A_hat stream
                x_spec,                                           # X (resident)
                pl.BlockSpec((c_in, c_out), lambda i, k: (0, 0)),  # resident W
                pl.BlockSpec((1, c_out), lambda i, k: (0, 0)),     # resident bias
            ],
            out_specs=pl.BlockSpec((tm, c_out), lambda i, k: (i, 0)),
            scratch_shapes=[pltpu.VMEM((tm, c_out), jnp.float32)],  # f32 acc
        ),
        compiler_params=pltpu.CompilerParams(
            dimension_semantics=("parallel", "arbitrary"),
            vmem_limit_bytes=_vmem_limit_bytes(),
        ),
    )(a_p, x_p, w_p, b_p)


def _fused_two_layer(a_p, x_p, w1_p, b1_p, w2_p, b2_p):
    """Both layers in one pallas_call; everything (incl. A_hat) VMEM-resident."""
    n_pad = a_p.shape[0]
    c_out = w2_p.shape[1]
    return pl.pallas_call(
        _fused_two_layer_kernel,
        out_shape=jax.ShapeDtypeStruct((n_pad, c_out), jnp.float32),
        compiler_params=pltpu.CompilerParams(
            vmem_limit_bytes=_vmem_limit_bytes(),
        ),
    )(a_p, x_p, w1_p, b1_p, w2_p, b2_p)


# ----------------------------------------------------------------------------
# Full GCN forward
# ----------------------------------------------------------------------------
@functools.partial(jax.jit, static_argnames=("out_channels", "force_tiled"))
def gcn_forward(a_hat_p, x, w1_p, b1_p, w2_p, b2_p, *, out_channels,
                force_tiled=False):
    n = x.shape[0]
    n_pad = a_hat_p.shape[0]
    in_pad = w1_p.shape[0]

    # Only the tiny per-call input x is padded/cast inside the jit.
    x_p = _pad2d(x, n_pad, in_pad).astype(jnp.bfloat16)

    if (not force_tiled) and n_pad <= _FUSED_MAX_NPAD:
        out_p = _fused_two_layer(a_hat_p, x_p, w1_p, b1_p, w2_p, b2_p)
    else:
        # Layer 1: H = relu(A_hat @ (X @ W1) + b1)   (H kept in bf16)
        h = _gcn_layer(a_hat_p, x_p, w1_p, b1_p,
                       apply_relu=True, out_dtype=jnp.bfloat16)
        # Layer 2: out = A_hat @ (H @ W2) + b2
        out_p = _gcn_layer(a_hat_p, h, w2_p, b2_p,
                           apply_relu=False, out_dtype=jnp.float32)
    return out_p[:n, :out_channels]


# ----------------------------------------------------------------------------
# Graph / parameter preprocessing (plain-JAX glue, done ONCE outside the jit)
# ----------------------------------------------------------------------------
def build_norm_adj(edge_index, num_nodes):
    """Padded bf16 D^{-1/2} (A + I) D^{-1/2} from edge_index [2, E] (src, dst).

    Hoisted out of the forward pass per the perf review: the pad + f32->bf16
    cast of the N x N matrix is paid once, not on every call.
    """
    src, dst = edge_index[0], edge_index[1]
    loop = jnp.arange(num_nodes, dtype=edge_index.dtype)
    src = jnp.concatenate([src, loop])
    dst = jnp.concatenate([dst, loop])
    # adj[i, j] = weight of edge j -> i (messages flow source -> target).
    adj = jnp.zeros((num_nodes, num_nodes), jnp.float32).at[dst, src].add(1.0)
    deg = adj.sum(axis=1)
    dinv = jnp.where(deg > 0.0, jax.lax.rsqrt(deg), 0.0)
    a_hat = dinv[:, None] * adj * dinv[None, :]
    n_pad = _round_up(num_nodes, 128)
    return _pad2d(a_hat, n_pad, n_pad).astype(jnp.bfloat16)


def prepare_params(w1, b1, w2, b2):
    """Pad feature dims to 128 lanes and cast weights to bf16, once."""
    in_c, hid_c = w1.shape
    out_c = w2.shape[1]
    in_p, hid_p, out_p = (_round_up(c, 128) for c in (in_c, hid_c, out_c))
    w1_p = _pad2d(w1, in_p, hid_p).astype(jnp.bfloat16)
    w2_p = _pad2d(w2, hid_p, out_p).astype(jnp.bfloat16)
    b1_p = _pad2d(b1.reshape(1, -1), 1, hid_p).astype(jnp.float32)
    b2_p = _pad2d(b2.reshape(1, -1), 1, out_p).astype(jnp.float32)
    return w1_p, b1_p, w2_p, b2_p


def glorot(key, shape):
    fan_in, fan_out = shape
    limit = jnp.sqrt(6.0 / (fan_in + fan_out))
    return jax.random.uniform(key, shape, jnp.float32, -limit, limit)


if __name__ == "__main__":
    key = jax.random.PRNGKey(0)
    N = 16            # number of graph nodes
    IN_C = 8          # in_channels
    HID_C = 32        # hidden_channels
    OUT_C = 8         # out_channels
    E = 40            # number of directed edges

    k_x, k_e, k_w1, k_w2, k_b1, k_b2 = jax.random.split(key, 6)

    x = jax.random.normal(k_x, (N, IN_C), jnp.float32)
    edge_index = jax.random.randint(k_e, (2, E), 0, N, dtype=jnp.int32)

    # Glorot weights as in PyG GCNConv; small random biases to exercise the
    # bias-add path (PyG default init is zeros, which forward() is agnostic to).
    w1 = glorot(k_w1, (IN_C, HID_C))
    w2 = glorot(k_w2, (HID_C, OUT_C))
    b1 = 0.1 * jax.random.normal(k_b1, (HID_C,), jnp.float32)
    b2 = 0.1 * jax.random.normal(k_b2, (OUT_C,), jnp.float32)

    # One-time preprocessing (hoisted out of the per-call forward).
    a_hat_p = build_norm_adj(edge_index, N)
    w1_p, b1_p, w2_p, b2_p = prepare_params(w1, b1, w2, b2)

    # Small-graph fused path (default) and the tiled large-graph path.
    out_fused = gcn_forward(a_hat_p, x, w1_p, b1_p, w2_p, b2_p,
                            out_channels=OUT_C)
    out_tiled = gcn_forward(a_hat_p, x, w1_p, b1_p, w2_p, b2_p,
                            out_channels=OUT_C, force_tiled=True)
    out_fused, out_tiled = jax.block_until_ready((out_fused, out_tiled))

    # Pure-JAX reference mirroring the bf16 compute path (f32 accumulation).
    f32 = jnp.float32
    bf = lambda t: t.astype(jnp.bfloat16).astype(f32)
    a_r = a_hat_p[:N, :N].astype(f32)
    z1_r = bf(bf(x) @ bf(w1))
    h_r = bf(jnp.maximum(a_r @ z1_r + b1, 0.0))
    z2_r = bf(h_r @ bf(w2))
    ref = a_r @ z2_r + b2

    assert out_fused.shape == (N, OUT_C)
    assert out_tiled.shape == (N, OUT_C)
    for out in (out_fused, out_tiled):
        max_err = float(jnp.max(jnp.abs(out - ref)))
        assert jnp.allclose(out, ref, atol=2e-2, rtol=2e-2), max_err

    print("KERNEL_OK")
</pallas_src>

<mosaic_0001>
module attributes {stable_mosaic.version = 11 : i64} {
  func.func @_fused_two_layer_kernel(%arg0: memref<128x128xbf16, #tpu.memory_space<vmem>>, %arg1: memref<128x128xbf16, #tpu.memory_space<vmem>>, %arg2: memref<128x128xbf16, #tpu.memory_space<vmem>>, %arg3: memref<1x128xf32, #tpu.memory_space<vmem>>, %arg4: memref<128x128xbf16, #tpu.memory_space<vmem>>, %arg5: memref<1x128xf32, #tpu.memory_space<vmem>>, %arg6: memref<128x128xf32, #tpu.memory_space<vmem>>) attributes {dimension_semantics = [], scalar_prefetch = 0 : i64, scratch_operands = 0 : i64, tpu.core_type = #tpu.core_type<tc>} {
    %c0 = arith.constant 0 : index
    %c0_0 = arith.constant 0 : index
    %0 = vector.load %arg0[%c0, %c0_0] : memref<128x128xbf16, #tpu.memory_space<vmem>>, vector<128x128xbf16>
    %c0_1 = arith.constant 0 : index
    %c0_2 = arith.constant 0 : index
    %1 = vector.load %arg1[%c0_1, %c0_2] : memref<128x128xbf16, #tpu.memory_space<vmem>>, vector<128x128xbf16>
    %c0_3 = arith.constant 0 : index
    %c0_4 = arith.constant 0 : index
    %2 = vector.load %arg2[%c0_3, %c0_4] : memref<128x128xbf16, #tpu.memory_space<vmem>>, vector<128x128xbf16>
    %cst = arith.constant dense<0.000000e+00> : vector<128x128xf32>
    %3 = tpu.matmul %1, %2, %cst {dimension_numbers = #tpu.dot_dimension_numbers<[1], [0], [0], [1], [0, 0, 1, 1], [], []>} : vector<128x128xbf16>, vector<128x128xbf16>, vector<128x128xf32> -> vector<128x128xf32>
    %4 = arith.truncf %3 : vector<128x128xf32> to vector<128x128xbf16>
    %cst_5 = arith.constant dense<0.000000e+00> : vector<128x128xf32>
    %5 = tpu.matmul %0, %4, %cst_5 {dimension_numbers = #tpu.dot_dimension_numbers<[1], [0], [0], [1], [0, 0, 1, 1], [], []>} : vector<128x128xbf16>, vector<128x128xbf16>, vector<128x128xf32> -> vector<128x128xf32>
    %c0_6 = arith.constant 0 : index
    %c0_7 = arith.constant 0 : index
    %6 = vector.load %arg3[%c0_6, %c0_7] : memref<1x128xf32, #tpu.memory_space<vmem>>, vector<1x128xf32>
    %7 = vector.broadcast %6 : vector<1x128xf32> to vector<128x128xf32>
    %8 = arith.addf %5, %7 : vector<128x128xf32>
    %cst_8 = arith.constant 0.000000e+00 : f32
    %9 = vector.broadcast %cst_8 : f32 to vector<128x128xf32>
    %10 = arith.maximumf %8, %9 : vector<128x128xf32>
    %11 = arith.truncf %10 : vector<128x128xf32> to vector<128x128xbf16>
    %c0_9 = arith.constant 0 : index
    %c0_10 = arith.constant 0 : index
    %12 = vector.load %arg4[%c0_9, %c0_10] : memref<128x128xbf16, #tpu.memory_space<vmem>>, vector<128x128xbf16>
    %cst_11 = arith.constant dense<0.000000e+00> : vector<128x128xf32>
    %13 = tpu.matmul %11, %12, %cst_11 {dimension_numbers = #tpu.dot_dimension_numbers<[1], [0], [0], [1], [0, 0, 1, 1], [], []>} : vector<128x128xbf16>, vector<128x128xbf16>, vector<128x128xf32> -> vector<128x128xf32>
    %14 = arith.truncf %13 : vector<128x128xf32> to vector<128x128xbf16>
    %cst_12 = arith.constant dense<0.000000e+00> : vector<128x128xf32>
    %15 = tpu.matmul %0, %14, %cst_12 {dimension_numbers = #tpu.dot_dimension_numbers<[1], [0], [0], [1], [0, 0, 1, 1], [], []>} : vector<128x128xbf16>, vector<128x128xbf16>, vector<128x128xf32> -> vector<128x128xf32>
    %c0_13 = arith.constant 0 : index
    %c0_14 = arith.constant 0 : index
    %16 = vector.load %arg5[%c0_13, %c0_14] : memref<1x128xf32, #tpu.memory_space<vmem>>, vector<1x128xf32>
    %17 = vector.broadcast %16 : vector<1x128xf32> to vector<128x128xf32>
    %18 = arith.addf %15, %17 : vector<128x128xf32>
    %c0_15 = arith.constant 0 : index
    %c0_16 = arith.constant 0 : index
    %19 = vector.load %arg6[%c0_15, %c0_16] : memref<128x128xf32, #tpu.memory_space<vmem>>, vector<128x128xf32>
    tpu.vector_store %arg6[%c0_15, %c0_16], %18 {strides = array<i32>} : memref<128x128xf32, #tpu.memory_space<vmem>>, vector<128x128xf32>,
    return
  }
}

</mosaic_0001>

<llo_original>
// kernel: gcn_forward.1
$region0: #{gcn_forward.1}
  #allocation0 [shape = 'u32[]', space=smem, size = 0x4, offset = 0x4, fixed_abs, tag = 'smem constant byte address 0x4 - core index']
  #allocation1 [shape = 'u32[72,128]{1,0:T(1,128)}', space=vmem, size = 0x9000, scoped, tag = 'internal scratch']
  %s0 = inlined_call_operand.vmem [shape: bf16[128,128], index: 0, kind: input, shape index: {}]
  %s1 = inlined_call_operand.vmem [shape: bf16[128,128], index: 1, kind: input, shape index: {}]
  %s2 = inlined_call_operand.hbm [shape: bf16[128,128], index: 2, kind: input, shape index: {}]
  %s3 = inlined_call_operand.vmem [shape: f32[1,128], index: 3, kind: input, shape index: {}]
  %s4 = inlined_call_operand.hbm [shape: bf16[128,128], index: 4, kind: input, shape index: {}]
  %s5 = inlined_call_operand.vmem [shape: f32[1,128], index: 5, kind: input, shape index: {}]
  %s6 = inlined_call_operand.vmem [shape: f32[128,128], index: 6, kind: output, shape index: {}]
  %s7 = sld [smem:[#allocation0]]
  $region42: #{gcn_forward.1} parent=0
    _
  %s9 = ssub.s32 1, %s7
  %s10 = scalar_select 0, %s9, %s7
  $region1: #{gcn_forward.1} parent=0
    #allocation2 [shape = 'u8[32768]{0}', space=vmem, size = 0x8000, scoped, tag = 'input window, operand 2, single buffered']
    #allocation3 [shape = 's32[1]{0}', space=sflag, size = 0x4, scoped, tag = 'scoped memory for gcn_forward.1']
    #allocation4 [shape = 'u8[32768]{0}', space=vmem, size = 0x8000, scoped, tag = 'input window, operand 4, single buffered']
    #allocation5 [shape = 's32[1]{0}', space=sflag, size = 0x4, scoped, tag = 'scoped memory for gcn_forward.1']
    %11 = vsyncpa [#allocation3], 0
    %12 = vsyncpa [#allocation5], 0
    // Predicated region
    $region2: #{gcn_forward.1} parent=1 // pred_check
      _
    $region3: #{gcn_forward.1} parent=1 // pred_check_branch
      %14 = sbr.rel (0) target = $region5
    $region4: #{gcn_forward.1} parent=1 // pred_region
      _
    $region5: #{gcn_forward.1} parent=1 // pred_fallthru
      _
    // Predicated region
    $region6: #{gcn_forward.1} parent=1 // pred_check
      _
    $region7: #{gcn_forward.1} parent=1 // pred_check_branch
      %16 = sbr.rel (0) target = $region9
    $region8: #{gcn_forward.1} parent=1 // pred_region
      _
    $region9: #{gcn_forward.1} parent=1 // pred_fallthru
      _
    // Predicated region
    $region10: #{gcn_forward.1} parent=1 // pred_check
      _
    $region11: #{gcn_forward.1} parent=1 // pred_check_branch
      %18 = sbr.rel (0) target = $region13
    $region12: #{gcn_forward.1} parent=1 // pred_region
      %20 = vsyncadd [#allocation3], 0
      %s21 = sshll.u32 %s2, 4
      %s22 = int_to_ptr.hbm [resolvable:$true] %s21
      %s23 = sshll.u32 [#allocation2], 4
      %s24 = int_to_ptr.vmem [resolvable:$true] %s23
      %29 = dma.hbm_to_vmem [thread:$0]  %s22, 1024, %s24, [#allocation3], 64, 64, 4
    $region13: #{gcn_forward.1} parent=1 // pred_fallthru
      _
    // Predicated region
    $region14: #{gcn_forward.1} parent=1 // pred_check
      _
    $region15: #{gcn_forward.1} parent=1 // pred_check_branch
      %31 = sbr.rel (0) target = $region17
    $region16: #{gcn_forward.1} parent=1 // pred_region
      _
    $region17: #{gcn_forward.1} parent=1 // pred_fallthru
      _
    // Predicated region
    $region18: #{gcn_forward.1} parent=1 // pred_check
      _
    $region19: #{gcn_forward.1} parent=1 // pred_check_branch
      %33 = sbr.rel (0) target = $region21
    $region20: #{gcn_forward.1} parent=1 // pred_region
      %35 = vsyncadd [#allocation5], 0
      %s36 = sshll.u32 %s4, 4
      %s37 = int_to_ptr.hbm [resolvable:$true] %s36
      %s38 = sshll.u32 [#allocation4], 4
      %s39 = int_to_ptr.vmem [resolvable:$true] %s38
      %44 = dma.hbm_to_vmem [thread:$0]  %s37, 1024, %s39, [#allocation5], 64, 64, 4
    $region21: #{gcn_forward.1} parent=1 // pred_fallthru
      _
    // Predicated region
    $region22: #{gcn_forward.1} parent=1 // pred_check
      _
    $region23: #{gcn_forward.1} parent=1 // pred_check_branch
      %46 = sbr.rel (0) target = $region25
    $region24: #{gcn_forward.1} parent=1 // pred_region
      _
    $region25: #{gcn_forward.1} parent=1 // pred_fallthru
      _
    // Predicated region
    $region26: #{gcn_forward.1} parent=1 // pred_check
      _
    $region27: #{gcn_forward.1} parent=1 // pred_check_branch
      %48 = sbr.rel (0) target = $region29
    $region28: #{gcn_forward.1} parent=1 // pred_region
      %50 = dma.done [#allocation3], 1024
    $region29: #{gcn_forward.1} parent=1 // pred_fallthru
      _
    // Predicated region
    $region30: #{gcn_forward.1} parent=1 // pred_check
      _
    $region31: #{gcn_forward.1} parent=1 // pred_check_branch
      %52 = sbr.rel (0) target = $region33
    $region32: #{gcn_forward.1} parent=1 // pred_region
      %54 = dma.done [#allocation5], 1024
    $region33: #{gcn_forward.1} parent=1 // pred_fallthru
      _
    %v55 = vld [vmem:[%s0] sm:$0xf]
    %v56 = vld [vmem:[%s0 + $0x4] sm:$0xf]
    %v57 = vld [vmem:[%s0 + $0x8] sm:$0xf]
    %v58 = vld [vmem:[%s0 + $0xc] sm:$0xf]
    %v59 = vld [vmem:[%s0 + $0x10] sm:$0xf]
    %v60 = vld [vmem:[%s0 + $0x14] sm:$0xf]
    %v61 = vld [vmem:[%s0 + $0x18] sm:$0xf]
    %v62 = vld [vmem:[%s0 + $0x1c] sm:$0xf]
    %v63 = vld [vmem:[%s0 + $0x20] sm:$0xf]
    %v64 = vld [vmem:[%s0 + $0x24] sm:$0xf]
    %v65 = vld [vmem:[%s0 + $0x28] sm:$0xf]
    %v66 = vld [vmem:[%s0 + $0x2c] sm:$0xf]
    %v67 = vld [vmem:[%s0 + $0x30] sm:$0xf]
    %v68 = vld [vmem:[%s0 + $0x34] sm:$0xf]
    %v69 = vld [vmem:[%s0 + $0x38] sm:$0xf]
    %v70 = vld [vmem:[%s0 + $0x3c] sm:$0xf]
    %v71 = vld [vmem:[%s1] sm:$0xf]
    %v72 = vld [vmem:[%s1 + $0x4] sm:$0xf]
    %v73 = vld [vmem:[%s1 + $0x8] sm:$0xf]
    %v74 = vld [vmem:[%s1 + $0xc] sm:$0xf]
    %v75 = vld [vmem:[%s1 + $0x10] sm:$0xf]
    %v76 = vld [vmem:[%s1 + $0x14] sm:$0xf]
    %v77 = vld [vmem:[%s1 + $0x18] sm:$0xf]
    %v78 = vld [vmem:[%s1 + $0x1c] sm:$0xf]
    %v79 = vld [vmem:[%s1 + $0x20] sm:$0xf]
    %v80 = vld [vmem:[%s1 + $0x24] sm:$0xf]
    %v81 = vld [vmem:[%s1 + $0x28] sm:$0xf]
    %v82 = vld [vmem:[%s1 + $0x2c] sm:$0xf]
    %v83 = vld [vmem:[%s1 + $0x30] sm:$0xf]
    %v84 = vld [vmem:[%s1 + $0x34] sm:$0xf]
    %v85 = vld [vmem:[%s1 + $0x38] sm:$0xf]
    %v86 = vld [vmem:[%s1 + $0x3c] sm:$0xf]
    %v87 = vld [vmem:[#allocation2] sm:$0xf]
    %v88 = vld [vmem:[#allocation2 + $0x4] sm:$0xf]
    %v89 = vld [vmem:[#allocation2 + $0x8] sm:$0xf]
    %v90 = vld [vmem:[#allocation2 + $0xc] sm:$0xf]
    %v91 = vld [vmem:[#allocation2 + $0x10] sm:$0xf]
    %v92 = vld [vmem:[#allocation2 + $0x14] sm:$0xf]
    %v93 = vld [vmem:[#allocation2 + $0x18] sm:$0xf]
    %v94 = vld [vmem:[#allocation2 + $0x1c] sm:$0xf]
    %v95 = vld [vmem:[#allocation2 + $0x20] sm:$0xf]
    %v96 = vld [vmem:[#allocation2 + $0x24] sm:$0xf]
    %v97 = vld [vmem:[#allocation2 + $0x28] sm:$0xf]
    %v98 = vld [vmem:[#allocation2 + $0x2c] sm:$0xf]
    %v99 = vld [vmem:[#allocation2 + $0x30] sm:$0xf]
    %v100 = vld [vmem:[#allocation2 + $0x34] sm:$0xf]
    %v101 = vld [vmem:[#allocation2 + $0x38] sm:$0xf]
    %v102 = vld [vmem:[#allocation2 + $0x3c] sm:$0xf]
    %v119 = vunpack.c.l.b16 %v71
    %v120 = vunpack.c.l.b16 %v72
    %v121 = vunpack.c.l.b16 %v73
    %v122 = vunpack.c.l.b16 %v74
    %v123 = vunpack.c.l.b16 %v75
    %v124 = vunpack.c.l.b16 %v76
    %v125 = vunpack.c.l.b16 %v77
    %v126 = vunpack.c.l.b16 %v78
    %v127 = vunpack.c.l.b16 %v79
    %v128 = vunpack.c.l.b16 %v80
    %v129 = vunpack.c.l.b16 %v81
    %v130 = vunpack.c.l.b16 %v82
    %v131 = vunpack.c.l.b16 %v83
    %v132 = vunpack.c.l.b16 %v84
    %v133 = vunpack.c.l.b16 %v85
    %v134 = vunpack.c.l.b16 %v86
    %v135 = vpack.c.b16 %v120, %v119
    %v136 = vpack.c.b16 %v122, %v121
    %v137 = vpack.c.b16 %v124, %v123
    %v138 = vpack.c.b16 %v126, %v125
    %v139 = vpack.c.b16 %v128, %v127
    %v140 = vpack.c.b16 %v130, %v129
    %v141 = vpack.c.b16 %v132, %v131
    %v142 = vpack.c.b16 %v134, %v133
    %v167 = vunpack.c.l.b16 %v87
    %v168 = vunpack.c.l.b16 %v88
    %v169 = vunpack.c.l.b16 %v89
    %v170 = vunpack.c.l.b16 %v90
    %v171 = vunpack.c.l.b16 %v91
    %v172 = vunpack.c.l.b16 %v92
    %v173 = vunpack.c.l.b16 %v93
    %v174 = vunpack.c.l.b16 %v94
    %v175 = vunpack.c.l.b16 %v95
    %v176 = vunpack.c.l.b16 %v96
    %v177 = vunpack.c.l.b16 %v97
    %v178 = vunpack.c.l.b16 %v98
    %v179 = vunpack.c.l.b16 %v99
    %v180 = vunpack.c.l.b16 %v100
    %v181 = vunpack.c.l.b16 %v101
    %v182 = vunpack.c.l.b16 %v102
    %v183 = vpack.c.b16 %v168, %v167
    %v184 = vpack.c.b16 %v170, %v169
    %v185 = vpack.c.b16 %v172, %v171
    %v186 = vpack.c.b16 %v174, %v173
    %v187 = vpack.c.b16 %v176, %v175
    %v188 = vpack.c.b16 %v178, %v177
    %v189 = vpack.c.b16 %v180, %v179
    %v190 = vpack.c.b16 %v182, %v181
    %199 = vmatpush.bf16.msra.mxu0 %v190
    %200 = vmatpush.bf16.msra.mxu0 %v189
    %201 = vmatpush.bf16.msra.mxu0 %v188
    %202 = vmatpush.bf16.msra.mxu0 %v187
    %203 = vmatpush.bf16.msra.mxu0 %v186
    %204 = vmatpush.bf16.msra.mxu0 %v185
    %205 = vmatpush.bf16.msra.mxu0 %v184
    %206 = vmatpush.bf16.msra.mxu0 %v183
    %207 = vmatmul.bf16.gmra.mxu0 %v135
    %v208 = vpop.f32.mrf.mxu0
    %v209 = vadd.f32 0.0, %v208
    %v210 = vpop.f32.mrf.mxu0
    %v211 = vadd.f32 0.0, %v210
    %212 = vmatmul.bf16.gmra.mxu0 %v136
    %v213 = vpop.f32.mrf.mxu0
    %v214 = vadd.f32 0.0, %v213
    %v215 = vpop.f32.mrf.mxu0
    %v216 = vadd.f32 0.0, %v215
    %217 = vmatmul.bf16.gmra.mxu0 %v137
    %v218 = vpop.f32.mrf.mxu0
    %v219 = vadd.f32 0.0, %v218
    %v220 = vpop.f32.mrf.mxu0
    %v221 = vadd.f32 0.0, %v220
    %222 = vmatmul.bf16.gmra.mxu0 %v138
    %v223 = vpop.f32.mrf.mxu0
    %v224 = vadd.f32 0.0, %v223
    %v225 = vpop.f32.mrf.mxu0
    %v226 = vadd.f32 0.0, %v225
    %227 = vmatmul.bf16.gmra.mxu0 %v139
    %v228 = vpop.f32.mrf.mxu0
    %v229 = vadd.f32 0.0, %v228
    %v230 = vpop.f32.mrf.mxu0
    %v231 = vadd.f32 0.0, %v230
    %232 = vmatmul.bf16.gmra.mxu0 %v140
    %v233 = vpop.f32.mrf.mxu0
    %v234 = vadd.f32 0.0, %v233
    %v235 = vpop.f32.mrf.mxu0
    %v236 = vadd.f32 0.0, %v235
    %237 = vmatmul.bf16.gmra.mxu0 %v141
    %v238 = vpop.f32.mrf.mxu0
    %v239 = vadd.f32 0.0, %v238
    %v240 = vpop.f32.mrf.mxu0
    %v241 = vadd.f32 0.0, %v240
    %242 = vmatmul.bf16.gmra.mxu0 %v142
    %v243 = vpop.f32.mrf.mxu0
    %v244 = vadd.f32 0.0, %v243
    %v245 = vpop.f32.mrf.mxu0
    %v246 = vadd.f32 0.0, %v245
    %247 = vdwg.mxu0
    %v248 = vpack.c.bf16 %v211, %v209
    %v249 = vpack.c.bf16 %v216, %v214
    %v250 = vpack.c.bf16 %v221, %v219
    %v251 = vpack.c.bf16 %v226, %v224
    %v252 = vpack.c.bf16 %v231, %v229
    %v253 = vpack.c.bf16 %v236, %v234
    %v254 = vpack.c.bf16 %v241, %v239
    %v255 = vpack.c.bf16 %v246, %v244
    %v256 = vld [vmem:[%s3] sm:$0x1]
    %v258 = vperm.slane %v256, 0
    %v276 = vunpack.c.l.b16 %v55
    %v277 = vunpack.c.l.b16 %v56
    %v278 = vunpack.c.l.b16 %v57
    %v279 = vunpack.c.l.b16 %v58
    %v280 = vunpack.c.l.b16 %v59
    %v281 = vunpack.c.l.b16 %v60
    %v282 = vunpack.c.l.b16 %v61
    %v283 = vunpack.c.l.b16 %v62
    %v284 = vunpack.c.l.b16 %v63
    %v285 = vunpack.c.l.b16 %v64
    %v286 = vunpack.c.l.b16 %v65
    %v287 = vunpack.c.l.b16 %v66
    %v288 = vunpack.c.l.b16 %v67
    %v289 = vunpack.c.l.b16 %v68
    %v290 = vunpack.c.l.b16 %v69
    %v291 = vunpack.c.l.b16 %v70
    %v292 = vpack.c.b16 %v277, %v276
    %v293 = vpack.c.b16 %v279, %v278
    %v294 = vpack.c.b16 %v281, %v280
    %v295 = vpack.c.b16 %v283, %v282
    %v296 = vpack.c.b16 %v285, %v284
    %v297 = vpack.c.b16 %v287, %v286
    %v298 = vpack.c.b16 %v289, %v288
    %v299 = vpack.c.b16 %v291, %v290
    %308 = vmatpush.bf16.msra.mxu0 %v255
    %309 = vmatpush.bf16.msra.mxu0 %v254
    %310 = vmatpush.bf16.msra.mxu0 %v253
    %311 = vmatpush.bf16.msra.mxu0 %v252
    %312 = vmatpush.bf16.msra.mxu0 %v251
    %313 = vmatpush.bf16.msra.mxu0 %v250
    %314 = vmatpush.bf16.msra.mxu0 %v249
    %315 = vmatpush.bf16.msra.mxu0 %v248
    %316 = vmatmul.bf16.gmra.mxu0 %v292
    %v317 = vpop.f32.mrf.mxu0
    %v318 = vadd.f32 %v258, %v317
    %v319 = vpop.f32.mrf.mxu0
    %v320 = vadd.f32 %v258, %v319
    %321 = vmatmul.bf16.gmra.mxu0 %v293
    %v322 = vpop.f32.mrf.mxu0
    %v323 = vadd.f32 %v258, %v322
    %v324 = vpop.f32.mrf.mxu0
    %v325 = vadd.f32 %v258, %v324
    %326 = vmatmul.bf16.gmra.mxu0 %v294
    %v327 = vpop.f32.mrf.mxu0
    %v328 = vadd.f32 %v258, %v327
    %v329 = vpop.f32.mrf.mxu0
    %v330 = vadd.f32 %v258, %v329
    %331 = vmatmul.bf16.gmra.mxu0 %v295
    %v332 = vpop.f32.mrf.mxu0
    %v333 = vadd.f32 %v258, %v332
    %v334 = vpop.f32.mrf.mxu0
    %v335 = vadd.f32 %v258, %v334
    %336 = vmatmul.bf16.gmra.mxu0 %v296
    %v337 = vpop.f32.mrf.mxu0
    %v338 = vadd.f32 %v258, %v337
    %v339 = vpop.f32.mrf.mxu0
    %v340 = vadd.f32 %v258, %v339
    %341 = vmatmul.bf16.gmra.mxu0 %v297
    %v342 = vpop.f32.mrf.mxu0
    %v343 = vadd.f32 %v258, %v342
    %v344 = vpop.f32.mrf.mxu0
    %v345 = vadd.f32 %v258, %v344
    %346 = vmatmul.bf16.gmra.mxu0 %v298
    %v347 = vpop.f32.mrf.mxu0
    %v348 = vadd.f32 %v258, %v347
    %v349 = vpop.f32.mrf.mxu0
    %v350 = vadd.f32 %v258, %v349
    %351 = vmatmul.bf16.gmra.mxu0 %v299
    %v352 = vpop.f32.mrf.mxu0
    %v353 = vadd.f32 %v258, %v352
    %v354 = vpop.f32.mrf.mxu0
    %v355 = vadd.f32 %v258, %v354
    %356 = vdwg.mxu0
    %v357 = vmax.f32 %v318, 0.0
    %v358 = vmax.f32 %v320, 0.0
    %v359 = vmax.f32 %v323, 0.0
    %v360 = vmax.f32 %v325, 0.0
    %v361 = vmax.f32 %v328, 0.0
    %v362 = vmax.f32 %v330, 0.0
    %v363 = vmax.f32 %v333, 0.0
    %v364 = vmax.f32 %v335, 0.0
    %v365 = vmax.f32 %v338, 0.0
    %v366 = vmax.f32 %v340, 0.0
    %v367 = vmax.f32 %v343, 0.0
    %v368 = vmax.f32 %v345, 0.0
    %v369 = vmax.f32 %v348, 0.0
    %v370 = vmax.f32 %v350, 0.0
    %v371 = vmax.f32 %v353, 0.0
    %v372 = vmax.f32 %v355, 0.0
    %v373 = vpack.c.bf16 %v358, %v357
    %v374 = vpack.c.bf16 %v360, %v359
    %v375 = vpack.c.bf16 %v362, %v361
    %v376 = vpack.c.bf16 %v364, %v363
    %v377 = vpack.c.bf16 %v366, %v365
    %v378 = vpack.c.bf16 %v368, %v367
    %v379 = vpack.c.bf16 %v370, %v369
    %v380 = vpack.c.bf16 %v372, %v371
    %v381 = vld [vmem:[#allocation4] sm:$0xf]
    %v382 = vld [vmem:[#allocation4 + $0x4] sm:$0xf]
    %v383 = vld [vmem:[#allocation4 + $0x8] sm:$0xf]
    %v384 = vld [vmem:[#allocation4 + $0xc] sm:$0xf]
    %v385 = vld [vmem:[#allocation4 + $0x10] sm:$0xf]
    %v386 = vld [vmem:[#allocation4 + $0x14] sm:$0xf]
    %v387 = vld [vmem:[#allocation4 + $0x18] sm:$0xf]
    %v388 = vld [vmem:[#allocation4 + $0x1c] sm:$0xf]
    %v389 = vld [vmem:[#allocation4 + $0x20] sm:$0xf]
    %v390 = vld [vmem:[#allocation4 + $0x24] sm:$0xf]
    %v391 = vld [vmem:[#allocation4 + $0x28] sm:$0xf]
    %v392 = vld [vmem:[#allocation4 + $0x2c] sm:$0xf]
    %v393 = vld [vmem:[#allocation4 + $0x30] sm:$0xf]
    %v394 = vld [vmem:[#allocation4 + $0x34] sm:$0xf]
    %v395 = vld [vmem:[#allocation4 + $0x38] sm:$0xf]
    %v396 = vld [vmem:[#allocation4 + $0x3c] sm:$0xf]
    %v413 = vunpack.c.l.b16 %v381
    %v414 = vunpack.c.l.b16 %v382
    %v415 = vunpack.c.l.b16 %v383
    %v416 = vunpack.c.l.b16 %v384
    %v417 = vunpack.c.l.b16 %v385
    %v418 = vunpack.c.l.b16 %v386
    %v419 = vunpack.c.l.b16 %v387
    %v420 = vunpack.c.l.b16 %v388
    %v421 = vunpack.c.l.b16 %v389
    %v422 = vunpack.c.l.b16 %v390
    %v423 = vunpack.c.l.b16 %v391
    %v424 = vunpack.c.l.b16 %v392
    %v425 = vunpack.c.l.b16 %v393
    %v426 = vunpack.c.l.b16 %v394
    %v427 = vunpack.c.l.b16 %v395
    %v428 = vunpack.c.l.b16 %v396
    %v429 = vpack.c.b16 %v414, %v413
    %v430 = vpack.c.b16 %v416, %v415
    %v431 = vpack.c.b16 %v418, %v417
    %v432 = vpack.c.b16 %v420, %v419
    %v433 = vpack.c.b16 %v422, %v421
    %v434 = vpack.c.b16 %v424, %v423
    %v435 = vpack.c.b16 %v426, %v425
    %v436 = vpack.c.b16 %v428, %v427
    %445 = vmatpush.bf16.msra.mxu0 %v436
    %446 = vmatpush.bf16.msra.mxu0 %v435
    %447 = vmatpush.bf16.msra.mxu0 %v434
    %448 = vmatpush.bf16.msra.mxu0 %v433
    %449 = vmatpush.bf16.msra.mxu0 %v432
    %450 = vmatpush.bf16.msra.mxu0 %v431
    %451 = vmatpush.bf16.msra.mxu0 %v430
    %452 = vmatpush.bf16.msra.mxu0 %v429
    %453 = vmatmul.bf16.gmra.mxu0 %v373
    %v454 = vpop.f32.mrf.mxu0
    %v455 = vadd.f32 0.0, %v454
    %v456 = vpop.f32.mrf.mxu0
    %v457 = vadd.f32 0.0, %v456
    %458 = vmatmul.bf16.gmra.mxu0 %v374
    %v459 = vpop.f32.mrf.mxu0
    %v460 = vadd.f32 0.0, %v459
    %v461 = vpop.f32.mrf.mxu0
    %v462 = vadd.f32 0.0, %v461
    %463 = vmatmul.bf16.gmra.mxu0 %v375
    %v464 = vpop.f32.mrf.mxu0
    %v465 = vadd.f32 0.0, %v464
    %v466 = vpop.f32.mrf.mxu0
    %v467 = vadd.f32 0.0, %v466
    %468 = vmatmul.bf16.gmra.mxu0 %v376
    %v469 = vpop.f32.mrf.mxu0
    %v470 = vadd.f32 0.0, %v469
    %v471 = vpop.f32.mrf.mxu0
    %v472 = vadd.f32 0.0, %v471
    %473 = vmatmul.bf16.gmra.mxu0 %v377
    %v474 = vpop.f32.mrf.mxu0
    %v475 = vadd.f32 0.0, %v474
    %v476 = vpop.f32.mrf.mxu0
    %v477 = vadd.f32 0.0, %v476
    %478 = vmatmul.bf16.gmra.mxu0 %v378
    %v479 = vpop.f32.mrf.mxu0
    %v480 = vadd.f32 0.0, %v479
    %v481 = vpop.f32.mrf.mxu0
    %v482 = vadd.f32 0.0, %v481
    %483 = vmatmul.bf16.gmra.mxu0 %v379
    %v484 = vpop.f32.mrf.mxu0
    %v485 = vadd.f32 0.0, %v484
    %v486 = vpop.f32.mrf.mxu0
    %v487 = vadd.f32 0.0, %v486
    %488 = vmatmul.bf16.gmra.mxu0 %v380
    %v489 = vpop.f32.mrf.mxu0
    %v490 = vadd.f32 0.0, %v489
    %v491 = vpop.f32.mrf.mxu0
    %v492 = vadd.f32 0.0, %v491
    %493 = vdwg.mxu0
    %v494 = vpack.c.bf16 %v457, %v455
    %v495 = vpack.c.bf16 %v462, %v460
    %v496 = vpack.c.bf16 %v467, %v465
    %v497 = vpack.c.bf16 %v472, %v470
    %v498 = vpack.c.bf16 %v477, %v475
    %v499 = vpack.c.bf16 %v482, %v480
    %v500 = vpack.c.bf16 %v487, %v485
    %v501 = vpack.c.bf16 %v492, %v490
    %v502 = vld [vmem:[%s5] sm:$0x1]
    %v504 = vperm.slane %v502, 0
    %506 = vmatpush.bf16.msra.mxu0 %v501
    %507 = vmatpush.bf16.msra.mxu0 %v500
    %508 = vmatpush.bf16.msra.mxu0 %v499
    %509 = vmatpush.bf16.msra.mxu0 %v498
    %510 = vmatpush.bf16.msra.mxu0 %v497
    %511 = vmatpush.bf16.msra.mxu0 %v496
    %512 = vmatpush.bf16.msra.mxu0 %v495
    %513 = vmatpush.bf16.msra.mxu0 %v494
    %514 = vmatmul.bf16.gmra.mxu0 %v292
    %v515 = vpop.f32.mrf.mxu0
    %v516 = vadd.f32 %v504, %v515
    %v517 = vpop.f32.mrf.mxu0
    %v518 = vadd.f32 %v504, %v517
    %519 = vmatmul.bf16.gmra.mxu0 %v293
    %v520 = vpop.f32.mrf.mxu0
    %v521 = vadd.f32 %v504, %v520
    %v522 = vpop.f32.mrf.mxu0
    %v523 = vadd.f32 %v504, %v522
    %524 = vmatmul.bf16.gmra.mxu0 %v294
    %v525 = vpop.f32.mrf.mxu0
    %v526 = vadd.f32 %v504, %v525
    %v527 = vpop.f32.mrf.mxu0
    %v528 = vadd.f32 %v504, %v527
    %529 = vmatmul.bf16.gmra.mxu0 %v295
    %v530 = vpop.f32.mrf.mxu0
    %v531 = vadd.f32 %v504, %v530
    %v532 = vpop.f32.mrf.mxu0
    %v533 = vadd.f32 %v504, %v532
    %534 = vmatmul.bf16.gmra.mxu0 %v296
    %v535 = vpop.f32.mrf.mxu0
    %v536 = vadd.f32 %v504, %v535
    %v537 = vpop.f32.mrf.mxu0
    %v538 = vadd.f32 %v504, %v537
    %539 = vmatmul.bf16.gmra.mxu0 %v297
    %v540 = vpop.f32.mrf.mxu0
    %v541 = vadd.f32 %v504, %v540
    %v542 = vpop.f32.mrf.mxu0
    %v543 = vadd.f32 %v504, %v542
    %544 = vmatmul.bf16.gmra.mxu0 %v298
    %v545 = vpop.f32.mrf.mxu0
    %v546 = vadd.f32 %v504, %v545
    %v547 = vpop.f32.mrf.mxu0
    %v548 = vadd.f32 %v504, %v547
    %549 = vmatmul.bf16.gmra.mxu0 %v299
    %v550 = vpop.f32.mrf.mxu0
    %v551 = vadd.f32 %v504, %v550
    %v552 = vpop.f32.mrf.mxu0
    %v553 = vadd.f32 %v504, %v552
    %554 = vdwg.mxu0
    %555 = vst [vmem:[%s6] sm:$0xff] %v516
    %556 = vst [vmem:[%s6 + $0x8] sm:$0xff] %v518
    %557 = vst [vmem:[%s6 + $0x10] sm:$0xff] %v521
    %558 = vst [vmem:[%s6 + $0x18] sm:$0xff] %v523
    %559 = vst [vmem:[%s6 + $0x20] sm:$0xff] %v526
    %560 = vst [vmem:[%s6 + $0x28] sm:$0xff] %v528
    %561 = vst [vmem:[%s6 + $0x30] sm:$0xff] %v531
    %562 = vst [vmem:[%s6 + $0x38] sm:$0xff] %v533
    %563 = vst [vmem:[%s6 + $0x40] sm:$0xff] %v536
    %564 = vst [vmem:[%s6 + $0x48] sm:$0xff] %v538
    %565 = vst [vmem:[%s6 + $0x50] sm:$0xff] %v541
    %566 = vst [vmem:[%s6 + $0x58] sm:$0xff] %v543
    %567 = vst [vmem:[%s6 + $0x60] sm:$0xff] %v546
    %568 = vst [vmem:[%s6 + $0x68] sm:$0xff] %v548
    %569 = vst [vmem:[%s6 + $0x70] sm:$0xff] %v551
    %570 = vst [vmem:[%s6 + $0x78] sm:$0xff] %v553
    // Predicated region
    $region34: #{gcn_forward.1} parent=1 // pred_check
      _
    $region35: #{gcn_forward.1} parent=1 // pred_check_branch
      %572 = sbr.rel (0) target = $region37
    $region36: #{gcn_forward.1} parent=1 // pred_region
      _
    $region37: #{gcn_forward.1} parent=1 // pred_fallthru
      _
    // Predicated region
    $region38: #{gcn_forward.1} parent=1 // pred_check
      _
    $region39: #{gcn_forward.1} parent=1 // pred_check_branch
      %574 = sbr.rel (0) target = $region41
    $region40: #{gcn_forward.1} parent=1 // pred_region
      _
    $region41: #{gcn_forward.1} parent=1 // pred_fallthru
      _
    %575 = vsyncpa [#allocation3], 1
    %576 = vsyncpa [#allocation5], 1

</llo_original>
